<compile_context>
chip_gen: v7x
topology: tpu7x:2x2x1
jax: 0.10.0
libtpu: 0.0.40
codegen_flags: <defaults>
</compile_context>

<pallas_src>
import jax
import jax.numpy as jnp
import numpy as np
from jax.experimental import pallas as pl
from jax.experimental.pallas import tpu as pltpu

KH = KW = 3          # fixed 3x3 kernel (nn.Conv2d(1, 1, 3))
LANE_WIDTH = 128     # TPU vreg lane count


def conv2d_kernel(w_ref, b_ref, x_ref, o_ref):
    """Direct 3x3 VALID conv on lane-packed images.

    w_ref: (9,)  flattened conv weight, SMEM (scalar-prefetched)
    b_ref: (1,)  bias, SMEM (scalar-prefetched)
    x_ref: (BG, H, L)   L = SLOTS * W lane-packed input, VMEM
    o_ref: (BG, Ho, L)  lane-dense output (2 dead columns per image slot), VMEM
    """
    ho = o_ref.shape[1]
    lanes = x_ref.shape[2]
    x = x_ref[...].astype(jnp.float32)

    # kw shifts: one XLU lane-rotation per tap column, computed once.
    # roll by (lanes - kw) gives result[j] = x[j + kw] for every lane we keep;
    # wrapped lanes only land in the stripped dead columns.
    shifted = [x]
    for kw in range(1, KW):
        shifted.append(pltpu.roll(x, shift=lanes - kw, axis=2))

    # 9 scalar-broadcast multiply-adds on the VPU, accumulated in f32.
    acc = jnp.full(o_ref.shape, b_ref[0], dtype=jnp.float32)
    for kh in range(KH):
        for kw in range(KW):
            acc = acc + w_ref[kh * KW + kw] * shifted[kw][:, kh:kh + ho, :]
    o_ref[...] = acc.astype(o_ref.dtype)


def conv2d_1in_1out_3x3(x, weight, bias, *, max_block_bytes=1 << 20):
    """x: (N, 1, H, W) f32; weight: (1, 1, 3, 3); bias: (1,). Returns (N, 1, H-2, W-2)."""
    N, C, H, W = x.shape
    assert C == 1, "ConvNet uses a single input channel"
    Ho, Wo = H - KH + 1, W - KW + 1

    # Images packed side-by-side along the 128-lane axis (fallback: 1 image/slot).
    slots = LANE_WIDTH // W if (W <= LANE_WIDTH and LANE_WIDTH % W == 0) else 1
    lanes = slots * W

    # Groups of lane-packed images; BG groups per grid step (VMEM-bounded block).
    G = pl.cdiv(N, slots)
    bytes_per_group = H * lanes * 4
    BG = max(1, min(G, max_block_bytes // bytes_per_group))
    G_pad = pl.cdiv(G, BG) * BG
    N_pad = G_pad * slots

    x3 = x.reshape(N, H, W).astype(jnp.float32)
    if N_pad != N:
        x3 = jnp.concatenate(
            [x3, jnp.zeros((N_pad - N, H, W), jnp.float32)], axis=0)
    # (G, slots, H, W) -> (G, H, slots, W) -> (G, H, slots*W): lane = slot*W + w
    x_packed = (x3.reshape(G_pad, slots, H, W)
                .transpose(0, 2, 1, 3)
                .reshape(G_pad, H, lanes))

    w_flat = weight.reshape(KH * KW).astype(jnp.float32)
    b = bias.reshape(1).astype(jnp.float32)

    out_packed = pl.pallas_call(
        conv2d_kernel,
        out_shape=jax.ShapeDtypeStruct((G_pad, Ho, lanes), jnp.float32),
        grid_spec=pltpu.PrefetchScalarGridSpec(
            num_scalar_prefetch=2,                     # weight + bias land in SMEM
            grid=(G_pad // BG,),
            in_specs=[
                pl.BlockSpec((BG, H, lanes), lambda g, w_r, b_r: (g, 0, 0)),
            ],
            out_specs=pl.BlockSpec((BG, Ho, lanes), lambda g, w_r, b_r: (g, 0, 0)),
        ),
        compiler_params=pltpu.CompilerParams(dimension_semantics=("parallel",)),
    )(w_flat, b, x_packed)

    # Unpack: strip the dead columns (Wo..W-1) of each slot and the padded images.
    out = (out_packed.reshape(G_pad, Ho, slots, W)
           .transpose(0, 2, 1, 3)
           .reshape(N_pad, Ho, W)[:N, :, :Wo])
    return out.reshape(N, 1, Ho, Wo)


def _reference_conv(x, weight, bias):
    # Plain-JAX reference (same semantics as torch Conv2d, NCHW / OIHW, VALID padding).
    y = jax.lax.conv_general_dilated(
        x, weight, window_strides=(1, 1), padding="VALID",
        dimension_numbers=("NCHW", "OIHW", "NCHW"),
    )
    return y + bias.reshape(1, -1, 1, 1)


if __name__ == "__main__":
    key = jax.random.PRNGKey(0)
    kx, kw_key, kb = jax.random.split(key, 3)

    # Deterministic synthetic parameters (shapes per nn.Conv2d(1, 1, 3)).
    N, C, H, W = 2, 1, 16, 16
    x = jax.random.normal(kx, (N, C, H, W), dtype=jnp.float32)
    fan_in = C * KH * KW
    bound = 1.0 / np.sqrt(fan_in)  # PyTorch default init range
    weight = jax.random.uniform(kw_key, (1, 1, KH, KW), minval=-bound, maxval=bound,
                                dtype=jnp.float32)
    bias = jax.random.uniform(kb, (1,), minval=-bound, maxval=bound, dtype=jnp.float32)

    out = jax.block_until_ready(conv2d_1in_1out_3x3(x, weight, bias))
    ref = jax.block_until_ready(_reference_conv(x, weight, bias))

    assert out.shape == (N, 1, H - 2, W - 2), out.shape
    assert np.allclose(np.asarray(out), np.asarray(ref), atol=1e-5, rtol=1e-5)

    print("KERNEL_OK")
</pallas_src>

<mosaic_0001>
module attributes {stable_mosaic.version = 11 : i64} {
  func.func @conv2d_kernel(%arg0: i32, %arg1: memref<9xf32, #tpu.memory_space<smem>>, %arg2: memref<1xf32, #tpu.memory_space<smem>>, %arg3: memref<1x16x128xf32, #tpu.memory_space<vmem>>, %arg4: memref<1x14x128xf32, #tpu.memory_space<vmem>>) attributes {dimension_semantics = [#tpu.dimension_semantics<parallel>], iteration_bounds = array<i64: 1>, scalar_prefetch = 2 : i64, scratch_operands = 0 : i64, tpu.core_type = #tpu.core_type<tc>, window_params = [{transform_indices = @transform_0, window_bounds = array<i64: 1, 16, 128>}, {transform_indices = @transform_1, window_bounds = array<i64: 1, 14, 128>}]} {
    %c0 = arith.constant 0 : index
    %c0_0 = arith.constant 0 : index
    %c0_1 = arith.constant 0 : index
    %0 = vector.load %arg3[%c0, %c0_0, %c0_1] : memref<1x16x128xf32, #tpu.memory_space<vmem>>, vector<1x16x128xf32>
    %c127_i32 = arith.constant 127 : i32
    %1 = tpu.dynamic_rotate %0 by %c127_i32 dim 2 : vector<1x16x128xf32>, i32 -> vector<1x16x128xf32>
    %c126_i32 = arith.constant 126 : i32
    %2 = tpu.dynamic_rotate %0 by %c126_i32 dim 2 : vector<1x16x128xf32>, i32 -> vector<1x16x128xf32>
    %c0_2 = arith.constant 0 : index
    %3 = memref.load %arg2[%c0_2] : memref<1xf32, #tpu.memory_space<smem>>
    %4 = vector.broadcast %3 : f32 to vector<1x14x128xf32>
    %c0_3 = arith.constant 0 : index
    %5 = memref.load %arg1[%c0_3] : memref<9xf32, #tpu.memory_space<smem>>
    %6 = vector.extract_strided_slice %0 {offsets = [0, 0, 0], sizes = [1, 14, 128], strides = [1, 1, 1]} : vector<1x16x128xf32> to vector<1x14x128xf32>
    %7 = vector.broadcast %5 : f32 to vector<1x14x128xf32>
    %8 = arith.mulf %7, %6 : vector<1x14x128xf32>
    %9 = arith.addf %4, %8 : vector<1x14x128xf32>
    %c1 = arith.constant 1 : index
    %10 = memref.load %arg1[%c1] : memref<9xf32, #tpu.memory_space<smem>>
    %11 = vector.extract_strided_slice %1 {offsets = [0, 0, 0], sizes = [1, 14, 128], strides = [1, 1, 1]} : vector<1x16x128xf32> to vector<1x14x128xf32>
    %12 = vector.broadcast %10 : f32 to vector<1x14x128xf32>
    %13 = arith.mulf %12, %11 : vector<1x14x128xf32>
    %14 = arith.addf %9, %13 : vector<1x14x128xf32>
    %c2 = arith.constant 2 : index
    %15 = memref.load %arg1[%c2] : memref<9xf32, #tpu.memory_space<smem>>
    %16 = vector.extract_strided_slice %2 {offsets = [0, 0, 0], sizes = [1, 14, 128], strides = [1, 1, 1]} : vector<1x16x128xf32> to vector<1x14x128xf32>
    %17 = vector.broadcast %15 : f32 to vector<1x14x128xf32>
    %18 = arith.mulf %17, %16 : vector<1x14x128xf32>
    %19 = arith.addf %14, %18 : vector<1x14x128xf32>
    %c3 = arith.constant 3 : index
    %20 = memref.load %arg1[%c3] : memref<9xf32, #tpu.memory_space<smem>>
    %21 = vector.extract_strided_slice %0 {offsets = [0, 1, 0], sizes = [1, 14, 128], strides = [1, 1, 1]} : vector<1x16x128xf32> to vector<1x14x128xf32>
    %22 = vector.broadcast %20 : f32 to vector<1x14x128xf32>
    %23 = arith.mulf %22, %21 : vector<1x14x128xf32>
    %24 = arith.addf %19, %23 : vector<1x14x128xf32>
    %c4 = arith.constant 4 : index
    %25 = memref.load %arg1[%c4] : memref<9xf32, #tpu.memory_space<smem>>
    %26 = vector.extract_strided_slice %1 {offsets = [0, 1, 0], sizes = [1, 14, 128], strides = [1, 1, 1]} : vector<1x16x128xf32> to vector<1x14x128xf32>
    %27 = vector.broadcast %25 : f32 to vector<1x14x128xf32>
    %28 = arith.mulf %27, %26 : vector<1x14x128xf32>
    %29 = arith.addf %24, %28 : vector<1x14x128xf32>
    %c5 = arith.constant 5 : index
    %30 = memref.load %arg1[%c5] : memref<9xf32, #tpu.memory_space<smem>>
    %31 = vector.extract_strided_slice %2 {offsets = [0, 1, 0], sizes = [1, 14, 128], strides = [1, 1, 1]} : vector<1x16x128xf32> to vector<1x14x128xf32>
    %32 = vector.broadcast %30 : f32 to vector<1x14x128xf32>
    %33 = arith.mulf %32, %31 : vector<1x14x128xf32>
    %34 = arith.addf %29, %33 : vector<1x14x128xf32>
    %c6 = arith.constant 6 : index
    %35 = memref.load %arg1[%c6] : memref<9xf32, #tpu.memory_space<smem>>
    %36 = vector.extract_strided_slice %0 {offsets = [0, 2, 0], sizes = [1, 14, 128], strides = [1, 1, 1]} : vector<1x16x128xf32> to vector<1x14x128xf32>
    %37 = vector.broadcast %35 : f32 to vector<1x14x128xf32>
    %38 = arith.mulf %37, %36 : vector<1x14x128xf32>
    %39 = arith.addf %34, %38 : vector<1x14x128xf32>
    %c7 = arith.constant 7 : index
    %40 = memref.load %arg1[%c7] : memref<9xf32, #tpu.memory_space<smem>>
    %41 = vector.extract_strided_slice %1 {offsets = [0, 2, 0], sizes = [1, 14, 128], strides = [1, 1, 1]} : vector<1x16x128xf32> to vector<1x14x128xf32>
    %42 = vector.broadcast %40 : f32 to vector<1x14x128xf32>
    %43 = arith.mulf %42, %41 : vector<1x14x128xf32>
    %44 = arith.addf %39, %43 : vector<1x14x128xf32>
    %c8 = arith.constant 8 : index
    %45 = memref.load %arg1[%c8] : memref<9xf32, #tpu.memory_space<smem>>
    %46 = vector.extract_strided_slice %2 {offsets = [0, 2, 0], sizes = [1, 14, 128], strides = [1, 1, 1]} : vector<1x16x128xf32> to vector<1x14x128xf32>
    %47 = vector.broadcast %45 : f32 to vector<1x14x128xf32>
    %48 = arith.mulf %47, %46 : vector<1x14x128xf32>
    %49 = arith.addf %44, %48 : vector<1x14x128xf32>
    %c0_4 = arith.constant 0 : index
    %c0_5 = arith.constant 0 : index
    %c0_6 = arith.constant 0 : index
    %50 = vector.load %arg4[%c0_4, %c0_5, %c0_6] : memref<1x14x128xf32, #tpu.memory_space<vmem>>, vector<1x14x128xf32>
    tpu.vector_store %arg4[%c0_4, %c0_5, %c0_6], %49 {strides = array<i32>} : memref<1x14x128xf32, #tpu.memory_space<vmem>>, vector<1x14x128xf32>,
    return
  }
  func.func @transform_0(%arg0: i32, %arg1: memref<9xf32, #tpu.memory_space<smem>>, %arg2: memref<1xf32, #tpu.memory_space<smem>>) -> (i32, i32, i32) {
    %c0_i32 = arith.constant 0 : i32
    %c0_i32_0 = arith.constant 0 : i32
    %c0_i32_1 = arith.constant 0 : i32
    return %arg0, %c0_i32, %c0_i32_0 : i32, i32, i32
  }
  func.func @transform_1(%arg0: i32, %arg1: memref<9xf32, #tpu.memory_space<smem>>, %arg2: memref<1xf32, #tpu.memory_space<smem>>) -> (i32, i32, i32) {
    %c0_i32 = arith.constant 0 : i32
    %c0_i32_0 = arith.constant 0 : i32
    %c0_i32_1 = arith.constant 0 : i32
    return %arg0, %c0_i32, %c0_i32_0 : i32, i32, i32
  }
}

</mosaic_0001>

<llo_original>
// kernel: tpu_custom_call.1
$region0: #{tpu_custom_call.1}
  #allocation0 [shape = 'u32[]', space=smem, size = 0x4, offset = 0x4, fixed_abs, tag = 'smem constant byte address 0x4 - core index']
  #allocation1 [shape = 'u32[144,128]{1,0:T(1,128)}', space=vmem, size = 0x12000, scoped, tag = 'internal scratch']
  #allocation2 [shape = 's32[1]{0}', space=sflag, size = 0x4, scoped, tag = 'scoped memory for tpu_custom_call.1']
  #allocation3 [shape = 'u8[512]{0}', space=smem, size = 0x200, scoped, tag = 'prefetched SMEM operand 0']
  #allocation4 [shape = 'f32[1]{0:T(128)S(6)}', space=smem, size = 0x200, scoped, tag = 'prefetched SMEM operand 1']
  %s0 = inlined_call_operand.vmem [shape: f32[9], index: 0, kind: input, shape index: {}]
  %s1 = inlined_call_operand.<no memory space> [shape: f32[1], index: 1, kind: input, shape index: {}]
  %s2 = inlined_call_operand.hbm [shape: f32[1,16,128], index: 2, kind: input, shape index: {}]
  %s3 = inlined_call_operand.vmem [shape: f32[1,14,128], index: 3, kind: output, shape index: {}]
  %s4 = sld [smem:[#allocation0]]
  $region18: #{tpu_custom_call.1} parent=0
    _
  %s6 = ssub.s32 1, %s4
  %s7 = scalar_select 0, %s6, %s4
  %s8 = sshll.u32 %s0, 4
  %s9 = int_to_ptr.vmem [resolvable:$true] %s8
  %11 = dma.vmem_to_smem %s9, 16, [#allocation3], [#allocation2]
  %12 = sst [smem:[#allocation4]] %s1
  %13 = dma.done [#allocation2], 16
  %14 = sfence
  $region1: #{tpu_custom_call.1} parent=0
    #allocation5 [shape = 'u8[8192]{0}', space=vmem, size = 0x2000, scoped, tag = 'input window, operand 2, single buffered']
    #allocation6 [shape = 's32[1]{0}', space=sflag, size = 0x4, scoped, tag = 'scoped memory for tpu_custom_call.1']
    %15 = vsyncpa [#allocation6], 0
    // Predicated region
    $region2: #{tpu_custom_call.1} parent=1 // pred_check
      _
    $region3: #{tpu_custom_call.1} parent=1 // pred_check_branch
      %17 = sbr.rel (0) target = $region5
    $region4: #{tpu_custom_call.1} parent=1 // pred_region
      %s19 = ssub.s32 256, 256
      %20 = vsyncadd [#allocation6], %s19
      %s21 = sshll.u32 [#allocation5], 4
      %s22 = int_to_ptr.vmem [resolvable:$true] %s21
      %27 = dma.hbm_to_vmem [thread:$0]  %s2, 256, %s22, [#allocation6], 128, 128, 8
    $region5: #{tpu_custom_call.1} parent=1 // pred_fallthru
      _
    // Predicated region
    $region6: #{tpu_custom_call.1} parent=1 // pred_check
      _
    $region7: #{tpu_custom_call.1} parent=1 // pred_check_branch
      %29 = sbr.rel (0) target = $region9
    $region8: #{tpu_custom_call.1} parent=1 // pred_region
      %30 = dma.done [#allocation6], 256
    $region9: #{tpu_custom_call.1} parent=1 // pred_fallthru
      _
    %v31 = vld [vmem:[#allocation5] sm:$0xff]
    %v32 = vld [vmem:[#allocation5 + $0x8] sm:$0xff]
    %33 = vrot.lane.b32.xlu0 %v31, 127
    %v34 = vpop.permute.xlu0 %33
    %35 = vrot.lane.b32.xlu0 %v32, 127
    %v36 = vpop.permute.xlu0 %35
    %37 = vrot.lane.b32.xlu0 %v31, 126
    %v38 = vpop.permute.xlu0 %37
    %39 = vrot.lane.b32.xlu0 %v32, 126
    %v40 = vpop.permute.xlu0 %39
    %s41 = sld [smem:[#allocation4]]
    %v42 = vstv %s41
    %s43 = sld [smem:[#allocation3]]
    %v44 = vstv %s43
    %v45 = vmul.f32 %v44, %v31
    %v46 = vmul.f32 %v44, %v32
    %v47 = vadd.f32 %v42, %v45
    %v48 = vadd.f32 %v42, %v46
    %s49 = sld [smem:[#allocation3 + $0x1]]
    %v50 = vstv %s49
    %v51 = vmul.f32 %v50, %v34
    %v52 = vmul.f32 %v50, %v36
    %v53 = vadd.f32 %v47, %v51
    %v54 = vadd.f32 %v48, %v52
    %s55 = sld [smem:[#allocation3 + $0x2]]
    %v56 = vstv %s55
    %v57 = vmul.f32 %v56, %v38
    %v58 = vmul.f32 %v56, %v40
    %v59 = vadd.f32 %v53, %v57
    %v60 = vadd.f32 %v54, %v58
    %s61 = sld [smem:[#allocation3 + $0x3]]
    %v62 = vstv %s61
    %v63 = vmul.f32 %v62, %v31
    %v64 = vmul.f32 %v62, %v32
    %vm67 = vcmask 1046528
    %v68 = vrot.slane %v63, 1
    %v69 = vrot.slane %v64, 1
    %v70 = vsel %vm67, %v68, %v69
    %v73 = vadd.f32 %v59, %v70
    %v74 = vadd.f32 %v60, %v69
    %s75 = sld [smem:[#allocation3 + $0x4]]
    %v76 = vstv %s75
    %v77 = vmul.f32 %v76, %v34
    %v78 = vmul.f32 %v76, %v36
    %v81 = vrot.slane %v77, 1
    %v82 = vrot.slane %v78, 1
    %v83 = vsel %vm67, %v81, %v82
    %v86 = vadd.f32 %v73, %v83
    %v87 = vadd.f32 %v74, %v82
    %s88 = sld [smem:[#allocation3 + $0x5]]
    %v89 = vstv %s88
    %v90 = vmul.f32 %v89, %v38
    %v91 = vmul.f32 %v89, %v40
    %v94 = vrot.slane %v90, 1
    %v95 = vrot.slane %v91, 1
    %v96 = vsel %vm67, %v94, %v95
    %v99 = vadd.f32 %v86, %v96
    %v100 = vadd.f32 %v87, %v95
    %s101 = sld [smem:[#allocation3 + $0x6]]
    %v102 = vstv %s101
    %v103 = vmul.f32 %v102, %v31
    %v104 = vmul.f32 %v102, %v32
    %vm107 = vcmask 1045504
    %v108 = vrot.slane %v103, 2
    %v109 = vrot.slane %v104, 2
    %v110 = vsel %vm107, %v108, %v109
    %v113 = vadd.f32 %v99, %v110
    %v114 = vadd.f32 %v100, %v109
    %s115 = sld [smem:[#allocation3 + $0x7]]
    %v116 = vstv %s115
    %v117 = vmul.f32 %v116, %v34
    %v118 = vmul.f32 %v116, %v36
    %v121 = vrot.slane %v117, 2
    %v122 = vrot.slane %v118, 2
    %v123 = vsel %vm107, %v121, %v122
    %v126 = vadd.f32 %v113, %v123
    %v127 = vadd.f32 %v114, %v122
    %s128 = sld [smem:[#allocation3 + $0x8]]
    %v129 = vstv %s128
    %v130 = vmul.f32 %v129, %v38
    %v131 = vmul.f32 %v129, %v40
    %v134 = vrot.slane %v130, 2
    %v135 = vrot.slane %v131, 2
    %v136 = vsel %vm107, %v134, %v135
    %v139 = vadd.f32 %v126, %v136
    %v140 = vadd.f32 %v127, %v135
    %141 = vst [vmem:[%s3] sm:$0xff] %v139
    %142 = vst [vmem:[%s3 + $0x8] sm:$0x3f] %v140
    // Predicated region
    $region10: #{tpu_custom_call.1} parent=1 // pred_check
      _
    $region11: #{tpu_custom_call.1} parent=1 // pred_check_branch
      %144 = sbr.rel (0) target = $region13
    $region12: #{tpu_custom_call.1} parent=1 // pred_region
      _
    $region13: #{tpu_custom_call.1} parent=1 // pred_fallthru
      _
    // Predicated region
    $region14: #{tpu_custom_call.1} parent=1 // pred_check
      _
    $region15: #{tpu_custom_call.1} parent=1 // pred_check_branch
      %146 = sbr.rel (0) target = $region17
    $region16: #{tpu_custom_call.1} parent=1 // pred_region
      _
    $region17: #{tpu_custom_call.1} parent=1 // pred_fallthru
      _
    %147 = vsyncpa [#allocation6], 1

</llo_original>
